<compile_context>
chip_gen: v7x
topology: tpu7x:2x2x1
jax: 0.10.0
libtpu: 0.0.40
codegen_flags: <defaults>
</compile_context>

<pallas_src>
import functools

import jax
import jax.numpy as jnp
from jax import lax
from jax.experimental import pallas as pl
from jax.experimental.pallas import tpu as pltpu


def _round_up(n, m):
    return ((n + m - 1) // m) * m


def _choose_batch_tile(B, block_b):
    """Batch tile: large (amortize ~0.35us/step), multiple of 256 when tiled,
    and >= 2 grid steps whenever the batch allows (v7x has 2 TensorCores)."""
    block_b = max(256, _round_up(block_b, 256))
    if B > block_b:
        return block_b
    if B >= 512:
        return min(block_b, _round_up(pl.cdiv(B, 2), 256))
    return B  # single tile covering the whole (small) batch


def _mlp_kernel(x_ref, w1_ref, b1_ref, w2_ref, b2_ref, w3t_ref, b3_ref, o_ref):
    # fc1 + ReLU: cast x f32->bf16 on the VPU (idle slack), MXU dot, f32 acc.
    x = x_ref[...].astype(jnp.bfloat16)
    h1 = jnp.dot(x, w1_ref[...], preferred_element_type=jnp.float32)
    h1 = jnp.maximum(h1 + b1_ref[...], 0.0)
    # fc2 + ReLU
    h2 = jnp.dot(h1.astype(jnp.bfloat16), w2_ref[...],
                 preferred_element_type=jnp.float32)
    h2 = jnp.maximum(h2 + b2_ref[...], 0.0)
    # fc3, transposed: contract (1,64) with (bb,64) on the feature axis ->
    # (1, bb) lane-dense slab (same pattern as q @ k^T).
    out_t = lax.dot_general(
        w3t_ref[...], h2.astype(jnp.bfloat16),
        dimension_numbers=(((1,), (1,)), ((), ())),
        preferred_element_type=jnp.float32)
    o_ref[...] = (out_t + b3_ref[...]).astype(o_ref.dtype)


@functools.partial(jax.jit, static_argnames=("block_b",))
def value_network_forward(x, params, block_b=1024):
    """x: (B, input_size) float32. params: (in,out) f32 weights / (1,out) biases."""
    B, in_dim = x.shape
    w1, b1 = params["w1"], params["b1"]
    w2, b2 = params["w2"], params["b2"]
    w3, b3 = params["w3"], params["b3"]
    h1_dim, h2_dim = w1.shape[1], w2.shape[1]

    # Weights are tiny -> cast (and transpose w3) in the wrapper; x stays f32.
    w1b = w1.astype(jnp.bfloat16)
    w2b = w2.astype(jnp.bfloat16)
    w3tb = w3.T.astype(jnp.bfloat16)           # (1, 64): PyTorch (out, in) layout
    b3r = b3.reshape(1, 1)

    bb = _choose_batch_tile(B, block_b)
    num_tiles = pl.cdiv(B, bb)
    bp = num_tiles * bb                        # padded batch (lane-dense output)

    cost = pl.CostEstimate(
        flops=2 * B * (in_dim * h1_dim + h1_dim * h2_dim + h2_dim * 1),
        transcendentals=0,
        bytes_accessed=(
            x.size * 4                                    # x (f32, read in-kernel)
            + (w1b.size + w2b.size + w3tb.size) * 2       # weights (bf16)
            + (b1.size + b2.size + b3r.size) * 4          # biases (f32)
            + bp * 4                                      # output (f32)
        ),
    )

    out2d = pl.pallas_call(
        _mlp_kernel,
        out_shape=jax.ShapeDtypeStruct((1, bp), x.dtype),
        grid_spec=pltpu.PrefetchScalarGridSpec(
            num_scalar_prefetch=0,
            grid=(num_tiles,),
            in_specs=[
                pl.BlockSpec((bb, in_dim), lambda i: (i, 0)),   # x tile (f32)
                pl.BlockSpec(w1b.shape, lambda i: (0, 0)),      # fc1 weight
                pl.BlockSpec(b1.shape, lambda i: (0, 0)),       # fc1 bias
                pl.BlockSpec(w2b.shape, lambda i: (0, 0)),      # fc2 weight
                pl.BlockSpec(b2.shape, lambda i: (0, 0)),       # fc2 bias
                pl.BlockSpec(w3tb.shape, lambda i: (0, 0)),     # fc3 weight^T
                pl.BlockSpec(b3r.shape, lambda i: (0, 0)),      # fc3 bias
            ],
            out_specs=pl.BlockSpec((1, bb), lambda i: (0, i)),  # lane-dense slab
        ),
        compiler_params=pltpu.CompilerParams(
            dimension_semantics=("parallel",)),
        cost_estimate=cost,
    )(x, w1b, b1, w2b, b2, w3tb, b3r)

    # (1, num_tiles*bb) -> (B, 1); reshape/slice are trace-level, padded rows
    # from the ragged edge block are discarded here.
    return out2d[0, :B].reshape(B, 1)


def init_value_network_params(key, input_size):
    """Deterministic init matching nn.Linear default (uniform(+-1/sqrt(in))).

    PyTorch stores weight as (out, in); we keep the transposed (in, out)
    layout so the kernel hot path is x @ W (w3 is re-transposed in the
    wrapper for the lane-dense fc3)."""
    def linear(key, fan_in, fan_out):
        kw, kb = jax.random.split(key)
        bound = 1.0 / jnp.sqrt(float(fan_in))
        w = jax.random.uniform(kw, (fan_in, fan_out), jnp.float32, -bound, bound)
        b = jax.random.uniform(kb, (1, fan_out), jnp.float32, -bound, bound)
        return w, b

    k1, k2, k3 = jax.random.split(key, 3)
    w1, b1 = linear(k1, input_size, 32)
    w2, b2 = linear(k2, 32, 64)
    w3, b3 = linear(k3, 64, 1)
    return {"w1": w1, "b1": b1, "w2": w2, "b2": b2, "w3": w3, "b3": b3}


def value_network_ref(x, params):
    """Pure-JAX f32 reference for correctness checking."""
    h1 = jnp.maximum(x @ params["w1"] + params["b1"], 0.0)
    h2 = jnp.maximum(h1 @ params["w2"] + params["b2"], 0.0)
    return h2 @ params["w3"] + params["b3"]


if __name__ == "__main__":
    key = jax.random.PRNGKey(0)
    k_params, k_x, k_x2 = jax.random.split(key, 3)

    input_size = 16
    params = init_value_network_params(k_params, input_size)

    # Main check: B=512 -> tile 256, grid (2,) so both v7x TensorCores engage.
    batch = 512
    x = jax.random.normal(k_x, (batch, input_size), dtype=jnp.float32)
    out = jax.block_until_ready(value_network_forward(x, params))
    ref = value_network_ref(x, params)
    assert out.shape == (batch, 1), out.shape
    # bf16 MXU operands (f32 accumulate) -> loosened tolerance vs f32 reference.
    assert jnp.allclose(out, ref, atol=2e-2, rtol=2e-2), "mismatch vs reference"

    # Ragged batch: exercises the partial edge block + padded-output slice path.
    batch2 = 300
    x2 = jax.random.normal(k_x2, (batch2, input_size), dtype=jnp.float32)
    out2 = jax.block_until_ready(value_network_forward(x2, params, block_b=256))
    ref2 = value_network_ref(x2, params)
    assert out2.shape == (batch2, 1), out2.shape
    assert jnp.allclose(out2, ref2, atol=2e-2, rtol=2e-2), "ragged mismatch"

    print("KERNEL_OK")
</pallas_src>

<mosaic_0001>
module attributes {stable_mosaic.version = 11 : i64} {
  func.func @_mlp_kernel(%arg0: i32, %arg1: memref<256x16xf32, #tpu.memory_space<vmem>>, %arg2: memref<16x32xbf16, #tpu.memory_space<vmem>>, %arg3: memref<1x32xf32, #tpu.memory_space<vmem>>, %arg4: memref<32x64xbf16, #tpu.memory_space<vmem>>, %arg5: memref<1x64xf32, #tpu.memory_space<vmem>>, %arg6: memref<1x64xbf16, #tpu.memory_space<vmem>>, %arg7: memref<1x1xf32, #tpu.memory_space<vmem>>, %arg8: memref<1x256xf32, #tpu.memory_space<vmem>>) attributes {dimension_semantics = [#tpu.dimension_semantics<parallel>], iteration_bounds = array<i64: 2>, scalar_prefetch = 0 : i64, scratch_operands = 0 : i64, tpu.core_type = #tpu.core_type<tc>, window_params = [{transform_indices = @transform_0, window_bounds = array<i64: 256, 16>}, {pipeline_mode = #tpu.pipeline_mode<synchronous>, transform_indices = @transform_1, window_bounds = array<i64: 16, 32>}, {pipeline_mode = #tpu.pipeline_mode<synchronous>, transform_indices = @transform_2, window_bounds = array<i64: 1, 32>}, {pipeline_mode = #tpu.pipeline_mode<synchronous>, transform_indices = @transform_3, window_bounds = array<i64: 32, 64>}, {pipeline_mode = #tpu.pipeline_mode<synchronous>, transform_indices = @transform_4, window_bounds = array<i64: 1, 64>}, {pipeline_mode = #tpu.pipeline_mode<synchronous>, transform_indices = @transform_5, window_bounds = array<i64: 1, 64>}, {pipeline_mode = #tpu.pipeline_mode<synchronous>, transform_indices = @transform_6, window_bounds = array<i64: 1, 1>}, {transform_indices = @transform_7, window_bounds = array<i64: 1, 256>}]} {
    %c0 = arith.constant 0 : index
    %c0_0 = arith.constant 0 : index
    %0 = vector.load %arg1[%c0, %c0_0] : memref<256x16xf32, #tpu.memory_space<vmem>>, vector<256x16xf32>
    %1 = arith.truncf %0 : vector<256x16xf32> to vector<256x16xbf16>
    %c0_1 = arith.constant 0 : index
    %c0_2 = arith.constant 0 : index
    %2 = vector.load %arg2[%c0_1, %c0_2] : memref<16x32xbf16, #tpu.memory_space<vmem>>, vector<16x32xbf16>
    %cst = arith.constant dense<0.000000e+00> : vector<256x32xf32>
    %3 = tpu.matmul %1, %2, %cst {dimension_numbers = #tpu.dot_dimension_numbers<[1], [0], [0], [1], [0, 0, 1, 1], [], []>} : vector<256x16xbf16>, vector<16x32xbf16>, vector<256x32xf32> -> vector<256x32xf32>
    %c0_3 = arith.constant 0 : index
    %c0_4 = arith.constant 0 : index
    %4 = vector.load %arg3[%c0_3, %c0_4] : memref<1x32xf32, #tpu.memory_space<vmem>>, vector<1x32xf32>
    %5 = vector.broadcast %4 : vector<1x32xf32> to vector<256x32xf32>
    %6 = arith.addf %3, %5 : vector<256x32xf32>
    %cst_5 = arith.constant 0.000000e+00 : f32
    %7 = vector.broadcast %cst_5 : f32 to vector<256x32xf32>
    %8 = arith.maximumf %6, %7 : vector<256x32xf32>
    %9 = arith.truncf %8 : vector<256x32xf32> to vector<256x32xbf16>
    %c0_6 = arith.constant 0 : index
    %c0_7 = arith.constant 0 : index
    %10 = vector.load %arg4[%c0_6, %c0_7] : memref<32x64xbf16, #tpu.memory_space<vmem>>, vector<32x64xbf16>
    %cst_8 = arith.constant dense<0.000000e+00> : vector<256x64xf32>
    %11 = tpu.matmul %9, %10, %cst_8 {dimension_numbers = #tpu.dot_dimension_numbers<[1], [0], [0], [1], [0, 0, 1, 1], [], []>} : vector<256x32xbf16>, vector<32x64xbf16>, vector<256x64xf32> -> vector<256x64xf32>
    %c0_9 = arith.constant 0 : index
    %c0_10 = arith.constant 0 : index
    %12 = vector.load %arg5[%c0_9, %c0_10] : memref<1x64xf32, #tpu.memory_space<vmem>>, vector<1x64xf32>
    %13 = vector.broadcast %12 : vector<1x64xf32> to vector<256x64xf32>
    %14 = arith.addf %11, %13 : vector<256x64xf32>
    %cst_11 = arith.constant 0.000000e+00 : f32
    %15 = vector.broadcast %cst_11 : f32 to vector<256x64xf32>
    %16 = arith.maximumf %14, %15 : vector<256x64xf32>
    %c0_12 = arith.constant 0 : index
    %c0_13 = arith.constant 0 : index
    %17 = vector.load %arg6[%c0_12, %c0_13] : memref<1x64xbf16, #tpu.memory_space<vmem>>, vector<1x64xbf16>
    %18 = arith.truncf %16 : vector<256x64xf32> to vector<256x64xbf16>
    %cst_14 = arith.constant dense<0.000000e+00> : vector<1x256xf32>
    %19 = tpu.matmul %17, %18, %cst_14 {dimension_numbers = #tpu.dot_dimension_numbers<[1], [1], [0], [0], [0, 0, 1, 0], [], []>} : vector<1x64xbf16>, vector<256x64xbf16>, vector<1x256xf32> -> vector<1x256xf32>
    %c0_15 = arith.constant 0 : index
    %c0_16 = arith.constant 0 : index
    %20 = vector.load %arg7[%c0_15, %c0_16] : memref<1x1xf32, #tpu.memory_space<vmem>>, vector<1x1xf32>
    %21 = vector.broadcast %20 : vector<1x1xf32> to vector<1x256xf32>
    %22 = arith.addf %19, %21 : vector<1x256xf32>
    %c0_17 = arith.constant 0 : index
    %c0_18 = arith.constant 0 : index
    %23 = vector.load %arg8[%c0_17, %c0_18] : memref<1x256xf32, #tpu.memory_space<vmem>>, vector<1x256xf32>
    tpu.vector_store %arg8[%c0_17, %c0_18], %22 {strides = array<i32>} : memref<1x256xf32, #tpu.memory_space<vmem>>, vector<1x256xf32>,
    return
  }
  func.func @transform_0(%arg0: i32) -> (i32, i32) {
    %c0_i32 = arith.constant 0 : i32
    %c0_i32_0 = arith.constant 0 : i32
    return %arg0, %c0_i32 : i32, i32
  }
  func.func @transform_1(%arg0: i32) -> (i32, i32) {
    %c0_i32 = arith.constant 0 : i32
    %c0_i32_0 = arith.constant 0 : i32
    %c0_i32_1 = arith.constant 0 : i32
    return %c0_i32, %c0_i32_0 : i32, i32
  }
  func.func @transform_2(%arg0: i32) -> (i32, i32) {
    %c0_i32 = arith.constant 0 : i32
    %c0_i32_0 = arith.constant 0 : i32
    %c0_i32_1 = arith.constant 0 : i32
    return %c0_i32, %c0_i32_0 : i32, i32
  }
  func.func @transform_3(%arg0: i32) -> (i32, i32) {
    %c0_i32 = arith.constant 0 : i32
    %c0_i32_0 = arith.constant 0 : i32
    %c0_i32_1 = arith.constant 0 : i32
    return %c0_i32, %c0_i32_0 : i32, i32
  }
  func.func @transform_4(%arg0: i32) -> (i32, i32) {
    %c0_i32 = arith.constant 0 : i32
    %c0_i32_0 = arith.constant 0 : i32
    %c0_i32_1 = arith.constant 0 : i32
    return %c0_i32, %c0_i32_0 : i32, i32
  }
  func.func @transform_5(%arg0: i32) -> (i32, i32) {
    %c0_i32 = arith.constant 0 : i32
    %c0_i32_0 = arith.constant 0 : i32
    %c0_i32_1 = arith.constant 0 : i32
    return %c0_i32, %c0_i32_0 : i32, i32
  }
  func.func @transform_6(%arg0: i32) -> (i32, i32) {
    %c0_i32 = arith.constant 0 : i32
    %c0_i32_0 = arith.constant 0 : i32
    %c0_i32_1 = arith.constant 0 : i32
    return %c0_i32, %c0_i32_0 : i32, i32
  }
  func.func @transform_7(%arg0: i32) -> (i32, i32) {
    %c0_i32 = arith.constant 0 : i32
    %c0_i32_0 = arith.constant 0 : i32
    return %c0_i32, %arg0 : i32, i32
  }
}

</mosaic_0001>

<llo_original>
// kernel: value_network_forward.1
$region0: #{value_network_forward.1}
  #allocation0 [shape = 'u32[]', space=smem, size = 0x4, offset = 0x4, fixed_abs, tag = 'smem constant byte address 0x4 - core index']
  #allocation1 [shape = 'u32[144,128]{1,0:T(1,128)}', space=vmem, size = 0x12000, scoped, tag = 'internal scratch']
  #allocation2 [shape = 'f32[1,1]{1,0:T(1,128)S(1)}', space=vmem, size = 0x200, scoped, tag = 'scoped memory for value_network_forward.1']
  %s0 = inlined_call_operand.vmem [shape: f32[512,16], index: 0, kind: input, shape index: {}]
  %s1 = inlined_call_operand.vmem [shape: bf16[16,32], index: 1, kind: input, shape index: {}]
  %s2 = inlined_call_operand.vmem [shape: f32[1,32], index: 2, kind: input, shape index: {}]
  %s3 = inlined_call_operand.vmem [shape: bf16[32,64], index: 3, kind: input, shape index: {}]
  %s4 = inlined_call_operand.vmem [shape: f32[1,64], index: 4, kind: input, shape index: {}]
  %s5 = inlined_call_operand.vmem [shape: bf16[1,64], index: 5, kind: input, shape index: {}]
  %s6 = inlined_call_operand.<no memory space> [shape: f32[1,1], index: 6, kind: input, shape index: {}]
  %s7 = inlined_call_operand.hbm [shape: f32[1,512], index: 7, kind: output, shape index: {}]
  %s8 = sld [smem:[#allocation0]]
  $region61: #{value_network_forward.1} parent=0
    _
  %s10 = ssub.s32 1, %s8
  %s11 = scalar_select 0, %s10, %s8
  %v12 = vstv %s6
  %13 = vst [vmem:[#allocation2] sm:$0x1] %v12
  $region1: #{value_network_forward.1} parent=0
    #allocation3 [shape = 'u8[2048]{0}', space=vmem, size = 0x800, scoped, tag = 'output window, operand 0']
    #allocation4 [shape = 's32[2]{0}', space=sflag, size = 0x8, scoped, tag = 'scoped memory for value_network_forward.1']
    %14 = vsyncpa [#allocation4], 0
    %s15 = scalar_lea.sflag [#allocation4], 1
    %16 = vsyncpa %s15, 0
    loop: start=0, step=1, limit=4
    $region2: #{value_network_forward.1} parent=1 // loop_pre_header
      _
    $region3: #{value_network_forward.1} parent=1 // loop_header
      %s18 = sphi 0, %s22
      %p19 = scmp.ge.s32.totalorder %s18, 4
      %s28 = sphi 0, %s30
      %s31 = sphi 0, %s28
      %s32 = sphi 0, %s31
      %s48 = sphi 0, %s32
      %s52 = sphi 0, %s52
      %s54 = sphi 0, %s52
      %s55 = sphi 0, %s54
      %s69 = sphi 0, %s55
      %s73 = sphi 0, %s73
      %s75 = sphi 0, %s73
      %s76 = sphi 0, %s75
      %s90 = sphi 0, %s76
      %s94 = sphi 0, %s94
      %s96 = sphi 0, %s94
      %s97 = sphi 0, %s96
      %s111 = sphi 0, %s97
      %s115 = sphi 0, %s115
      %s117 = sphi 0, %s115
      %s118 = sphi 0, %s117
      %s132 = sphi 0, %s118
      %s136 = sphi 0, %s136
      %s138 = sphi 0, %s136
      %s139 = sphi 0, %s138
      %s153 = sphi 0, %s139
      %s157 = sphi 0, %s157
      %s159 = sphi 0, %s157
      %s160 = sphi 0, %s159
      %s174 = sphi 0, %s160
      %s180 = sphi 0, %s182
      %s183 = sphi 0, %s180
      %s184 = sphi 0, %s183
      %s200 = sphi 0, %s184
    $region4: #{value_network_forward.1} parent=1 // loop_header_branch
      %21 = sbr.rel (%p19) target = $region8
    $region5: #{value_network_forward.1} parent=1 // loop_body
      %s23 = ssub.s32 %s18, 1
      %s24 = ssub.s32 %s18, 2
      %s25 = sadd.s32 %s18, 1
      %s26 = ssub.s32 %s18, %s25
      %p27 = scmp.eq.s32.totalorder %s26, 0
      %s29 = sadd.s32 %s28, 1
      %s30 = scalar_select %p27, %s28, %s29
      %p33 = pneg %p27
      %p34 = scmp.eq.s32.totalorder %s18, 1
      %p35 = por %p33, %p34
      %p36 = scmp.ne.s32.totalorder %s28, %s31
      %p37 = scmp.eq.s32.totalorder %s18, 0
      %p38 = por %p36, %p37
      %p39 = scmp.ne.s32.totalorder %s28, %s31
      %p40 = scmp.eq.s32.totalorder %s23, 1
      %p41 = por %p39, %p40
      %p42 = scmp.ne.s32.totalorder %s31, %s32
      %p43 = scmp.eq.s32.totalorder %s23, 0
      %p44 = por %p42, %p43
      %p45 = scmp.ne.s32.totalorder %s31, %s32
      %p46 = scmp.eq.s32.totalorder %s24, 1
      %p47 = por %p45, %p46
      %p49 = scmp.ne.s32.totalorder %s32, %s48
      %p50 = scmp.eq.s32.totalorder %s24, 0
      %p51 = por %p49, %p50
      %s53 = sadd.s32 %s52, 1
      %p56 = scmp.eq.s32.totalorder %s18, 1
      %p57 = scmp.ne.s32.totalorder %s52, %s54
      %p58 = scmp.eq.s32.totalorder %s18, 0
      %p59 = por %p57, %p58
      %p60 = scmp.ne.s32.totalorder %s52, %s54
      %p61 = scmp.eq.s32.totalorder %s23, 1
      %p62 = por %p60, %p61
      %p63 = scmp.ne.s32.totalorder %s54, %s55
      %p64 = scmp.eq.s32.totalorder %s23, 0
      %p65 = por %p63, %p64
      %p66 = scmp.ne.s32.totalorder %s54, %s55
      %p67 = scmp.eq.s32.totalorder %s24, 1
      %p68 = por %p66, %p67
      %p70 = scmp.ne.s32.totalorder %s55, %s69
      %p71 = scmp.eq.s32.totalorder %s24, 0
      %p72 = por %p70, %p71
      %s74 = sadd.s32 %s73, 1
      %p77 = scmp.eq.s32.totalorder %s18, 1
      %p78 = scmp.ne.s32.totalorder %s73, %s75
      %p79 = scmp.eq.s32.totalorder %s18, 0
      %p80 = por %p78, %p79
      %p81 = scmp.ne.s32.totalorder %s73, %s75
      %p82 = scmp.eq.s32.totalorder %s23, 1
      %p83 = por %p81, %p82
      %p84 = scmp.ne.s32.totalorder %s75, %s76
      %p85 = scmp.eq.s32.totalorder %s23, 0
      %p86 = por %p84, %p85
      %p87 = scmp.ne.s32.totalorder %s75, %s76
      %p88 = scmp.eq.s32.totalorder %s24, 1
      %p89 = por %p87, %p88
      %p91 = scmp.ne.s32.totalorder %s76, %s90
      %p92 = scmp.eq.s32.totalorder %s24, 0
      %p93 = por %p91, %p92
      %s95 = sadd.s32 %s94, 1
      %p98 = scmp.eq.s32.totalorder %s18, 1
      %p99 = scmp.ne.s32.totalorder %s94, %s96
      %p100 = scmp.eq.s32.totalorder %s18, 0
      %p101 = por %p99, %p100
      %p102 = scmp.ne.s32.totalorder %s94, %s96
      %p103 = scmp.eq.s32.totalorder %s23, 1
      %p104 = por %p102, %p103
      %p105 = scmp.ne.s32.totalorder %s96, %s97
      %p106 = scmp.eq.s32.totalorder %s23, 0
      %p107 = por %p105, %p106
      %p108 = scmp.ne.s32.totalorder %s96, %s97
      %p109 = scmp.eq.s32.totalorder %s24, 1
      %p110 = por %p108, %p109
      %p112 = scmp.ne.s32.totalorder %s97, %s111
      %p113 = scmp.eq.s32.totalorder %s24, 0
      %p114 = por %p112, %p113
      %s116 = sadd.s32 %s115, 1
      %p119 = scmp.eq.s32.totalorder %s18, 1
      %p120 = scmp.ne.s32.totalorder %s115, %s117
      %p121 = scmp.eq.s32.totalorder %s18, 0
      %p122 = por %p120, %p121
      %p123 = scmp.ne.s32.totalorder %s115, %s117
      %p124 = scmp.eq.s32.totalorder %s23, 1
      %p125 = por %p123, %p124
      %p126 = scmp.ne.s32.totalorder %s117, %s118
      %p127 = scmp.eq.s32.totalorder %s23, 0
      %p128 = por %p126, %p127
      %p129 = scmp.ne.s32.totalorder %s117, %s118
      %p130 = scmp.eq.s32.totalorder %s24, 1
      %p131 = por %p129, %p130
      %p133 = scmp.ne.s32.totalorder %s118, %s132
      %p134 = scmp.eq.s32.totalorder %s24, 0
      %p135 = por %p133, %p134
      %s137 = sadd.s32 %s136, 1
      %p140 = scmp.eq.s32.totalorder %s18, 1
      %p141 = scmp.ne.s32.totalorder %s136, %s138
      %p142 = scmp.eq.s32.totalorder %s18, 0
      %p143 = por %p141, %p142
      %p144 = scmp.ne.s32.totalorder %s136, %s138
      %p145 = scmp.eq.s32.totalorder %s23, 1
      %p146 = por %p144, %p145
      %p147 = scmp.ne.s32.totalorder %s138, %s139
      %p148 = scmp.eq.s32.totalorder %s23, 0
      %p149 = por %p147, %p148
      %p150 = scmp.ne.s32.totalorder %s138, %s139
      %p151 = scmp.eq.s32.totalorder %s24, 1
      %p152 = por %p150, %p151
      %p154 = scmp.ne.s32.totalorder %s139, %s153
      %p155 = scmp.eq.s32.totalorder %s24, 0
      %p156 = por %p154, %p155
      %s158 = sadd.s32 %s157, 1
      %p161 = scmp.eq.s32.totalorder %s18, 1
      %p162 = scmp.ne.s32.totalorder %s157, %s159
      %p163 = scmp.eq.s32.totalorder %s18, 0
      %p164 = por %p162, %p163
      %p165 = scmp.ne.s32.totalorder %s157, %s159
      %p166 = scmp.eq.s32.totalorder %s23, 1
      %p167 = por %p165, %p166
      %p168 = scmp.ne.s32.totalorder %s159, %s160
      %p169 = scmp.eq.s32.totalorder %s23, 0
      %p170 = por %p168, %p169
      %p171 = scmp.ne.s32.totalorder %s159, %s160
      %p172 = scmp.eq.s32.totalorder %s24, 1
      %p173 = por %p171, %p172
      %p175 = scmp.ne.s32.totalorder %s160, %s174
      %p176 = scmp.eq.s32.totalorder %s24, 0
      %p177 = por %p175, %p176
      %s178 = ssub.s32 %s18, %s25
      %p179 = scmp.eq.s32.totalorder %s178, 0
      %s181 = sadd.s32 %s180, 1
      %s182 = scalar_select %p179, %s180, %s181
      %p185 = pneg %p179
      %p186 = scmp.eq.s32.totalorder %s18, 1
      %p187 = por %p185, %p186
      %p188 = scmp.ne.s32.totalorder %s180, %s183
      %p189 = scmp.eq.s32.totalorder %s18, 0
      %p190 = por %p188, %p189
      %p191 = scmp.ne.s32.totalorder %s180, %s183
      %p192 = scmp.eq.s32.totalorder %s23, 1
      %p193 = por %p191, %p192
      %p194 = scmp.ne.s32.totalorder %s183, %s184
      %p195 = scmp.eq.s32.totalorder %s23, 0
      %p196 = por %p194, %p195
      %p197 = scmp.ne.s32.totalorder %s183, %s184
      %p198 = scmp.eq.s32.totalorder %s24, 1
      %p199 = por %p197, %p198
      %p201 = scmp.ne.s32.totalorder %s184, %s200
      %p202 = scmp.eq.s32.totalorder %s24, 0
      %p203 = por %p201, %p202
      %p204 = scmp.le.s32.totalorder 1, %s18
      %p205 = scmp.lt.s32.totalorder %s18, 3
      %p206 = pnand %p204, %p205
      %p207 = pneg %p206
      // Predicated region
      $region9: #{value_network_forward.1} parent=5 // pred_check
        _
      $region10: #{value_network_forward.1} parent=5 // pred_check_branch
        %209 = sbr.rel (%p206) target = $region12
      $region11: #{value_network_forward.1} parent=5 // pred_region
        %s210 = ssub.s32 %s18, 1
        // Predicated region
        $region13: #{value_network_forward.1} parent=11 // pred_check
          %p211 = pneg %p65
        $region14: #{value_network_forward.1} parent=11 // pred_check_branch
          %213 = sbr.rel (%p211) target = $region16
        $region15: #{value_network_forward.1} parent=11 // pred_region
          _
        $region16: #{value_network_forward.1} parent=11 // pred_fallthru
          _
        // Predicated region
        $region17: #{value_network_forward.1} parent=11 // pred_check
          %p214 = pneg %p86
        $region18: #{value_network_forward.1} parent=11 // pred_check_branch
          %216 = sbr.rel (%p214) target = $region20
        $region19: #{value_network_forward.1} parent=11 // pred_region
          _
        $region20: #{value_network_forward.1} parent=11 // pred_fallthru
          _
        // Predicated region
        $region21: #{value_network_forward.1} parent=11 // pred_check
          %p217 = pneg %p107
        $region22: #{value_network_forward.1} parent=11 // pred_check_branch
          %219 = sbr.rel (%p217) target = $region24
        $region23: #{value_network_forward.1} parent=11 // pred_region
          _
        $region24: #{value_network_forward.1} parent=11 // pred_fallthru
          _
        // Predicated region
        $region25: #{value_network_forward.1} parent=11 // pred_check
          %p220 = pneg %p128
        $region26: #{value_network_forward.1} parent=11 // pred_check_branch
          %222 = sbr.rel (%p220) target = $region28
        $region27: #{value_network_forward.1} parent=11 // pred_region
          _
        $region28: #{value_network_forward.1} parent=11 // pred_fallthru
          _
        // Predicated region
        $region29: #{value_network_forward.1} parent=11 // pred_check
          %p223 = pneg %p149
        $region30: #{value_network_forward.1} parent=11 // pred_check_branch
          %225 = sbr.rel (%p223) target = $region32
        $region31: #{value_network_forward.1} parent=11 // pred_region
          _
        $region32: #{value_network_forward.1} parent=11 // pred_fallthru
          _
        // Predicated region
        $region33: #{value_network_forward.1} parent=11 // pred_check
          %p226 = pneg %p170
        $region34: #{value_network_forward.1} parent=11 // pred_check_branch
          %228 = sbr.rel (%p226) target = $region36
        $region35: #{value_network_forward.1} parent=11 // pred_region
          _
        $region36: #{value_network_forward.1} parent=11 // pred_fallthru
          _
      $region12: #{value_network_forward.1} parent=5 // pred_fallthru
        _
      %p229 = scmp.lt.s32.totalorder %s18, 2
      // Predicated region
      $region37: #{value_network_forward.1} parent=5 // pred_check
        %p230 = pneg %p229
      $region38: #{value_network_forward.1} parent=5 // pred_check_branch
        %232 = sbr.rel (%p230) target = $region40
      $region39: #{value_network_forward.1} parent=5 // pred_region
        // Predicated region
        $region41: #{value_network_forward.1} parent=39 // pred_check
          %p233 = pneg %p38
        $region42: #{value_network_forward.1} parent=39 // pred_check_branch
          %235 = sbr.rel (%p233) target = $region44
        $region43: #{value_network_forward.1} parent=39 // pred_region
          %s236 = smul.u32 32, %s18
          %p237 = scmp.lt.s32.totalorder %s236, 63
          %s238 = scalar_select %p237, %s236, 63
          %s239 = smul.addr %s238, 8
          %s240 = scalar_lea.vmem %s0, %s239
          %s241 = smul.u32 32, %s18
        $region44: #{value_network_forward.1} parent=39 // pred_fallthru
          _
      $region40: #{value_network_forward.1} parent=5 // pred_fallthru
        _
      %p242 = scmp.le.s32.totalorder 1, %s18
      %p243 = scmp.lt.s32.totalorder %s18, 3
      %p244 = pnand %p242, %p243
      %p245 = pneg %p244
      // Predicated region
      $region45: #{value_network_forward.1} parent=5 // pred_check
        _
      $region46: #{value_network_forward.1} parent=5 // pred_check_branch
        %247 = sbr.rel (%p244) target = $region48
      $region47: #{value_network_forward.1} parent=5 // pred_region
        %s248 = ssub.s32 %s18, 1
        %s249 = smul.u32 32, %s23
        %p250 = scmp.lt.s32.totalorder %s249, 63
        %s251 = scalar_select %p250, %s249, 63
        %s252 = smul.addr %s251, 8
        %s253 = scalar_lea.vmem %s0, %s252
        %p254 = pneg %p44
        %p255 = pneg %p41
        %p256 = pneg %p65
        %p257 = pneg %p62
        %p258 = pneg %p86
        %p259 = pneg %p83
        %p260 = pneg %p107
        %p261 = pneg %p104
        %p262 = pneg %p128
        %p263 = pneg %p125
        %p264 = pneg %p149
        %p265 = pneg %p146
        %p266 = pneg %p170
        %p267 = pneg %p167
        %p268 = pneg %p196
        %p269 = pneg %p193
        %s270 = sand.u32 %s183, 1
        %s271 = scalar_lea.sflag [#allocation4], %s270
        %s272 = sand.u32 %s183, 1
        %s273 = smul.addr %s272, 2
        %s274 = scalar_lea.vmem [#allocation3], %s273
        %s275 = smul.u32 32, %s23
        %p276 = scmp.lt.s32.totalorder %s275, 63
        %s277 = scalar_select %p276, %s275, 63
        %s278 = smul.addr %s277, 8
        %s279 = scalar_lea.vmem %s0, %s278
        %s280 = smul.u32 32, %s23
        %s281 = smul.u32 2, %s23
        %v283 = vld [vmem:[%s279] sm:$0xff]
        %v284 = vld [vmem:[%s279 + $0x8] sm:$0xff]
        %v285 = vld [vmem:[%s279 + $0x10] sm:$0xff]
        %v286 = vld [vmem:[%s279 + $0x18] sm:$0xff]
        %v287 = vld [vmem:[%s279 + $0x20] sm:$0xff]
        %v288 = vld [vmem:[%s279 + $0x28] sm:$0xff]
        %v289 = vld [vmem:[%s279 + $0x30] sm:$0xff]
        %v290 = vld [vmem:[%s279 + $0x38] sm:$0xff]
        %v291 = vld [vmem:[%s279 + $0x40] sm:$0xff]
        %v292 = vld [vmem:[%s279 + $0x48] sm:$0xff]
        %v293 = vld [vmem:[%s279 + $0x50] sm:$0xff]
        %v294 = vld [vmem:[%s279 + $0x58] sm:$0xff]
        %v295 = vld [vmem:[%s279 + $0x60] sm:$0xff]
        %v296 = vld [vmem:[%s279 + $0x68] sm:$0xff]
        %v297 = vld [vmem:[%s279 + $0x70] sm:$0xff]
        %v298 = vld [vmem:[%s279 + $0x78] sm:$0xff]
        %v299 = vld [vmem:[%s279 + $0x80] sm:$0xff]
        %v300 = vld [vmem:[%s279 + $0x88] sm:$0xff]
        %v301 = vld [vmem:[%s279 + $0x90] sm:$0xff]
        %v302 = vld [vmem:[%s279 + $0x98] sm:$0xff]
        %v303 = vld [vmem:[%s279 + $0xa0] sm:$0xff]
        %v304 = vld [vmem:[%s279 + $0xa8] sm:$0xff]
        %v305 = vld [vmem:[%s279 + $0xb0] sm:$0xff]
        %v306 = vld [vmem:[%s279 + $0xb8] sm:$0xff]
        %v307 = vld [vmem:[%s279 + $0xc0] sm:$0xff]
        %v308 = vld [vmem:[%s279 + $0xc8] sm:$0xff]
        %v309 = vld [vmem:[%s279 + $0xd0] sm:$0xff]
        %v310 = vld [vmem:[%s279 + $0xd8] sm:$0xff]
        %v311 = vld [vmem:[%s279 + $0xe0] sm:$0xff]
        %v312 = vld [vmem:[%s279 + $0xe8] sm:$0xff]
        %v313 = vld [vmem:[%s279 + $0xf0] sm:$0xff]
        %v314 = vld [vmem:[%s279 + $0xf8] sm:$0xff]
        %v315 = vpack.c.bf16 %v284, %v283
        %v316 = vpack.c.bf16 %v286, %v285
        %v317 = vpack.c.bf16 %v288, %v287
        %v318 = vpack.c.bf16 %v290, %v289
        %v319 = vpack.c.bf16 %v292, %v291
        %v320 = vpack.c.bf16 %v294, %v293
        %v321 = vpack.c.bf16 %v296, %v295
        %v322 = vpack.c.bf16 %v298, %v297
        %v323 = vpack.c.bf16 %v300, %v299
        %v324 = vpack.c.bf16 %v302, %v301
        %v325 = vpack.c.bf16 %v304, %v303
        %v326 = vpack.c.bf16 %v306, %v305
        %v327 = vpack.c.bf16 %v308, %v307
        %v328 = vpack.c.bf16 %v310, %v309
        %v329 = vpack.c.bf16 %v312, %v311
        %v330 = vpack.c.bf16 %v314, %v313
        %v331 = vld [vmem:[%s1] sm:$0xf]
        %v332 = vld [vmem:[%s1 + $0x4] sm:$0xf]
        %v333 = vld [vmem:[%s2] sm:$0x1]
        %v335 = vlaneseq
        %v336 = vshrl.u32 %v335, 7
        %v337 = vsub.s32 0, %v336
        %v338 = vrot.slane %v333, %v337
        %v342 = vunpack.c.l.b16 %v331
        %v343 = vunpack.c.l.b16 %v332
        %v344 = vpack.c.b16 %v343, %v342
        %vm346 = vcmask 130048
        %v348 = vsel %vm346, %v315, 0
        %v351 = vsel %vm346, %v316, 0
        %v354 = vsel %vm346, %v317, 0
        %v357 = vsel %vm346, %v318, 0
        %v360 = vsel %vm346, %v319, 0
        %v363 = vsel %vm346, %v320, 0
        %v366 = vsel %vm346, %v321, 0
        %v369 = vsel %vm346, %v322, 0
        %v372 = vsel %vm346, %v323, 0
        %v375 = vsel %vm346, %v324, 0
        %v378 = vsel %vm346, %v325, 0
        %v381 = vsel %vm346, %v326, 0
        %v384 = vsel %vm346, %v327, 0
        %v387 = vsel %vm346, %v328, 0
        %v390 = vsel %vm346, %v329, 0
        %v393 = vsel %vm346, %v330, 0
        %395 = vmatprep.subr.bf16.mxu0 0
        %396 = vmatpush1.bf16.msra.mxu0 %v344
        %397 = vmatprep.subr.bf16.mxu0 0
        %398 = vmatpush1.bf16.msra.mxu0 0
        %399 = vmatprep.subr.bf16.mxu0 0
        %400 = vmatpush1.bf16.msra.mxu0 0
        %401 = vmatprep.subr.bf16.mxu0 0
        %402 = vmatpush1.bf16.msra.mxu0 0
        %403 = vmatprep.subr.bf16.mxu0 0
        %404 = vmatpush1.bf16.msra.mxu0 0
        %405 = vmatprep.subr.bf16.mxu0 0
        %406 = vmatpush1.bf16.msra.mxu0 0
        %407 = vmatprep.subr.bf16.mxu0 0
        %408 = vmatpush1.bf16.msra.mxu0 0
        %409 = vmatprep.subr.bf16.mxu0 0
        %410 = vmatpush1.bf16.msra.mxu0 0
        %411 = vmatprep.subr.bf16.mxu0 0
        %412 = vmatpush1.bf16.msra.mxu0 0
        %413 = vmatprep.subr.bf16.mxu0 0
        %414 = vmatpush1.bf16.msra.mxu0 0
        %415 = vmatprep.subr.bf16.mxu0 0
        %416 = vmatpush1.bf16.msra.mxu0 0
        %417 = vmatprep.subr.bf16.mxu0 0
        %418 = vmatpush1.bf16.msra.mxu0 0
        %419 = vmatprep.subr.bf16.mxu0 0
        %420 = vmatpush1.bf16.msra.mxu0 0
        %421 = vmatprep.subr.bf16.mxu0 0
        %422 = vmatpush1.bf16.msra.mxu0 0
        %423 = vmatprep.subr.bf16.mxu0 0
        %424 = vmatpush1.bf16.msra.mxu0 0
        %425 = vmatprep.subr.bf16.mxu0 0
        %426 = vmatpush1.bf16.msra.mxu0 0
        %427 = vmatprep.mubr.bf16.mxu0 0
        %428 = vmatmul.mubr.bf16.gmra.mrb[0].mxu0 %v348
        %v429 = vpop.f32.mrb[0].mxu0
        %v430 = vadd.f32 %v338, %v429
        %v431 = vpop.f32.mrb[0].mxu0
        %v432 = vpop.f32.mrb[0].mxu0
        %v433 = vadd.f32 %v338, %v432
        %v434 = vpop.f32.mrb[0].mxu0
        %435 = vmatprep.mubr.bf16.mxu0 0
        %436 = vmatmul.mubr.bf16.gmra.mrb[0].mxu0 %v351
        %v437 = vpop.f32.mrb[0].mxu0
        %v438 = vadd.f32 %v338, %v437
        %v439 = vpop.f32.mrb[0].mxu0
        %v440 = vpop.f32.mrb[0].mxu0
        %v441 = vadd.f32 %v338, %v440
        %v442 = vpop.f32.mrb[0].mxu0
        %443 = vmatprep.mubr.bf16.mxu0 0
        %444 = vmatmul.mubr.bf16.gmra.mrb[0].mxu0 %v354
        %v445 = vpop.f32.mrb[0].mxu0
        %v446 = vadd.f32 %v338, %v445
        %v447 = vpop.f32.mrb[0].mxu0
        %v448 = vpop.f32.mrb[0].mxu0
        %v449 = vadd.f32 %v338, %v448
        %v450 = vpop.f32.mrb[0].mxu0
        %451 = vmatprep.mubr.bf16.mxu0 0
        %452 = vmatmul.mubr.bf16.gmra.mrb[0].mxu0 %v357
        %v453 = vpop.f32.mrb[0].mxu0
        %v454 = vadd.f32 %v338, %v453
        %v455 = vpop.f32.mrb[0].mxu0
        %v456 = vpop.f32.mrb[0].mxu0
        %v457 = vadd.f32 %v338, %v456
        %v458 = vpop.f32.mrb[0].mxu0
        %459 = vmatprep.mubr.bf16.mxu0 0
        %460 = vmatmul.mubr.bf16.gmra.mrb[0].mxu0 %v360
        %v461 = vpop.f32.mrb[0].mxu0
        %v462 = vadd.f32 %v338, %v461
        %v463 = vpop.f32.mrb[0].mxu0
        %v464 = vpop.f32.mrb[0].mxu0
        %v465 = vadd.f32 %v338, %v464
        %v466 = vpop.f32.mrb[0].mxu0
        %467 = vmatprep.mubr.bf16.mxu0 0
        %468 = vmatmul.mubr.bf16.gmra.mrb[0].mxu0 %v363
        %v469 = vpop.f32.mrb[0].mxu0
        %v470 = vadd.f32 %v338, %v469
        %v471 = vpop.f32.mrb[0].mxu0
        %v472 = vpop.f32.mrb[0].mxu0
        %v473 = vadd.f32 %v338, %v472
        %v474 = vpop.f32.mrb[0].mxu0
        %475 = vmatprep.mubr.bf16.mxu0 0
        %476 = vmatmul.mubr.bf16.gmra.mrb[0].mxu0 %v366
        %v477 = vpop.f32.mrb[0].mxu0
        %v478 = vadd.f32 %v338, %v477
        %v479 = vpop.f32.mrb[0].mxu0
        %v480 = vpop.f32.mrb[0].mxu0
        %v481 = vadd.f32 %v338, %v480
        %v482 = vpop.f32.mrb[0].mxu0
        %483 = vmatprep.mubr.bf16.mxu0 0
        %484 = vmatmul.mubr.bf16.gmra.mrb[0].mxu0 %v369
        %v485 = vpop.f32.mrb[0].mxu0
        %v486 = vadd.f32 %v338, %v485
        %v487 = vpop.f32.mrb[0].mxu0
        %v488 = vpop.f32.mrb[0].mxu0
        %v489 = vadd.f32 %v338, %v488
        %v490 = vpop.f32.mrb[0].mxu0
        %491 = vmatprep.mubr.bf16.mxu0 0
        %492 = vmatmul.mubr.bf16.gmra.mrb[0].mxu0 %v372
        %v493 = vpop.f32.mrb[0].mxu0
        %v494 = vadd.f32 %v338, %v493
        %v495 = vpop.f32.mrb[0].mxu0
        %v496 = vpop.f32.mrb[0].mxu0
        %v497 = vadd.f32 %v338, %v496
        %v498 = vpop.f32.mrb[0].mxu0
        %499 = vmatprep.mubr.bf16.mxu0 0
        %500 = vmatmul.mubr.bf16.gmra.mrb[0].mxu0 %v375
        %v501 = vpop.f32.mrb[0].mxu0
        %v502 = vadd.f32 %v338, %v501
        %v503 = vpop.f32.mrb[0].mxu0
        %v504 = vpop.f32.mrb[0].mxu0
        %v505 = vadd.f32 %v338, %v504
        %v506 = vpop.f32.mrb[0].mxu0
        %507 = vmatprep.mubr.bf16.mxu0 0
        %508 = vmatmul.mubr.bf16.gmra.mrb[0].mxu0 %v378
        %v509 = vpop.f32.mrb[0].mxu0
        %v510 = vadd.f32 %v338, %v509
        %v511 = vpop.f32.mrb[0].mxu0
        %v512 = vpop.f32.mrb[0].mxu0
        %v513 = vadd.f32 %v338, %v512
        %v514 = vpop.f32.mrb[0].mxu0
        %515 = vmatprep.mubr.bf16.mxu0 0
        %516 = vmatmul.mubr.bf16.gmra.mrb[0].mxu0 %v381
        %v517 = vpop.f32.mrb[0].mxu0
        %v518 = vadd.f32 %v338, %v517
        %v519 = vpop.f32.mrb[0].mxu0
        %v520 = vpop.f32.mrb[0].mxu0
        %v521 = vadd.f32 %v338, %v520
        %v522 = vpop.f32.mrb[0].mxu0
        %523 = vmatprep.mubr.bf16.mxu0 0
        %524 = vmatmul.mubr.bf16.gmra.mrb[0].mxu0 %v384
        %v525 = vpop.f32.mrb[0].mxu0
        %v526 = vadd.f32 %v338, %v525
        %v527 = vpop.f32.mrb[0].mxu0
        %v528 = vpop.f32.mrb[0].mxu0
        %v529 = vadd.f32 %v338, %v528
        %v530 = vpop.f32.mrb[0].mxu0
        %531 = vmatprep.mubr.bf16.mxu0 0
        %532 = vmatmul.mubr.bf16.gmra.mrb[0].mxu0 %v387
        %v533 = vpop.f32.mrb[0].mxu0
        %v534 = vadd.f32 %v338, %v533
        %v535 = vpop.f32.mrb[0].mxu0
        %v536 = vpop.f32.mrb[0].mxu0
        %v537 = vadd.f32 %v338, %v536
        %v538 = vpop.f32.mrb[0].mxu0
        %539 = vmatprep.mubr.bf16.mxu0 0
        %540 = vmatmul.mubr.bf16.gmra.mrb[0].mxu0 %v390
        %v541 = vpop.f32.mrb[0].mxu0
        %v542 = vadd.f32 %v338, %v541
        %v543 = vpop.f32.mrb[0].mxu0
        %v544 = vpop.f32.mrb[0].mxu0
        %v545 = vadd.f32 %v338, %v544
        %v546 = vpop.f32.mrb[0].mxu0
        %547 = vmatprep.mubr.bf16.mxu0 0
        %548 = vmatmul.mubr.bf16.gmra.mrb[0].mxu0 %v393
        %v549 = vpop.f32.mrb[0].mxu0
        %v550 = vadd.f32 %v338, %v549
        %v551 = vpop.f32.mrb[0].mxu0
        %v552 = vpop.f32.mrb[0].mxu0
        %v553 = vadd.f32 %v338, %v552
        %v554 = vpop.f32.mrb[0].mxu0
        %555 = vdwg.mxu0
        %v556 = vmax.f32 %v430, 0.0
        %v557 = vmax.f32 %v433, 0.0
        %v558 = vmax.f32 %v438, 0.0
        %v559 = vmax.f32 %v441, 0.0
        %v560 = vmax.f32 %v446, 0.0
        %v561 = vmax.f32 %v449, 0.0
        %v562 = vmax.f32 %v454, 0.0
        %v563 = vmax.f32 %v457, 0.0
        %v564 = vmax.f32 %v462, 0.0
        %v565 = vmax.f32 %v465, 0.0
        %v566 = vmax.f32 %v470, 0.0
        %v567 = vmax.f32 %v473, 0.0
        %v568 = vmax.f32 %v478, 0.0
        %v569 = vmax.f32 %v481, 0.0
        %v570 = vmax.f32 %v486, 0.0
        %v571 = vmax.f32 %v489, 0.0
        %v572 = vmax.f32 %v494, 0.0
        %v573 = vmax.f32 %v497, 0.0
        %v574 = vmax.f32 %v502, 0.0
        %v575 = vmax.f32 %v505, 0.0
        %v576 = vmax.f32 %v510, 0.0
        %v577 = vmax.f32 %v513, 0.0
        %v578 = vmax.f32 %v518, 0.0
        %v579 = vmax.f32 %v521, 0.0
        %v580 = vmax.f32 %v526, 0.0
        %v581 = vmax.f32 %v529, 0.0
        %v582 = vmax.f32 %v534, 0.0
        %v583 = vmax.f32 %v537, 0.0
        %v584 = vmax.f32 %v542, 0.0
        %v585 = vmax.f32 %v545, 0.0
        %v586 = vmax.f32 %v550, 0.0
        %v587 = vmax.f32 %v553, 0.0
        %v588 = vpack.c.bf16 %v557, %v556
        %v589 = vpack.c.bf16 %v559, %v558
        %v590 = vpack.c.bf16 %v561, %v560
        %v591 = vpack.c.bf16 %v563, %v562
        %v592 = vpack.c.bf16 %v565, %v564
        %v593 = vpack.c.bf16 %v567, %v566
        %v594 = vpack.c.bf16 %v569, %v568
        %v595 = vpack.c.bf16 %v571, %v570
        %v596 = vpack.c.bf16 %v573, %v572
        %v597 = vpack.c.bf16 %v575, %v574
        %v598 = vpack.c.bf16 %v577, %v576
        %v599 = vpack.c.bf16 %v579, %v578
        %v600 = vpack.c.bf16 %v581, %v580
        %v601 = vpack.c.bf16 %v583, %v582
        %v602 = vpack.c.bf16 %v585, %v584
        %v603 = vpack.c.bf16 %v587, %v586
        %v604 = vld [vmem:[%s3] sm:$0xf]
        %v605 = vld [vmem:[%s3 + $0x4] sm:$0xf]
        %v606 = vld [vmem:[%s3 + $0x8] sm:$0xf]
        %v607 = vld [vmem:[%s3 + $0xc] sm:$0xf]
        %v608 = vld [vmem:[%s4] sm:$0x1]
        %v610 = vlaneseq
        %v611 = vshrl.u32 %v610, 7
        %v612 = vsub.s32 0, %v611
        %v613 = vrot.slane %v608, %v612
        %v619 = vunpack.c.l.b16 %v604
        %v620 = vunpack.c.l.b16 %v605
        %v621 = vunpack.c.l.b16 %v606
        %v622 = vunpack.c.l.b16 %v607
        %v623 = vpack.c.b16 %v620, %v619
        %v624 = vpack.c.b16 %v622, %v621
        %vm627 = vcmask 261120
        %v629 = vsel %vm627, %v588, 0
        %v632 = vsel %vm627, %v589, 0
        %v635 = vsel %vm627, %v590, 0
        %v638 = vsel %vm627, %v591, 0
        %v641 = vsel %vm627, %v592, 0
        %v644 = vsel %vm627, %v593, 0
        %v647 = vsel %vm627, %v594, 0
        %v650 = vsel %vm627, %v595, 0
        %v653 = vsel %vm627, %v596, 0
        %v656 = vsel %vm627, %v597, 0
        %v659 = vsel %vm627, %v598, 0
        %v662 = vsel %vm627, %v599, 0
        %v665 = vsel %vm627, %v600, 0
        %v668 = vsel %vm627, %v601, 0
        %v671 = vsel %vm627, %v602, 0
        %v674 = vsel %vm627, %v603, 0
        %676 = vmatprep.subr.bf16.mxu0 0
        %677 = vmatpush1.bf16.msra.mxu0 %v623
        %678 = vmatprep.subr.bf16.mxu0 0
        %679 = vmatpush1.bf16.msra.mxu0 %v624
        %680 = vmatprep.subr.bf16.mxu0 0
        %681 = vmatpush1.bf16.msra.mxu0 0
        %682 = vmatprep.subr.bf16.mxu0 0
        %683 = vmatpush1.bf16.msra.mxu0 0
        %684 = vmatprep.subr.bf16.mxu0 0
        %685 = vmatpush1.bf16.msra.mxu0 0
        %686 = vmatprep.subr.bf16.mxu0 0
        %687 = vmatpush1.bf16.msra.mxu0 0
        %688 = vmatprep.subr.bf16.mxu0 0
        %689 = vmatpush1.bf16.msra.mxu0 0
        %690 = vmatprep.subr.bf16.mxu0 0
        %691 = vmatpush1.bf16.msra.mxu0 0
        %692 = vmatprep.subr.bf16.mxu0 0
        %693 = vmatpush1.bf16.msra.mxu0 0
        %694 = vmatprep.subr.bf16.mxu0 0
        %695 = vmatpush1.bf16.msra.mxu0 0
        %696 = vmatprep.subr.bf16.mxu0 0
        %697 = vmatpush1.bf16.msra.mxu0 0
        %698 = vmatprep.subr.bf16.mxu0 0
        %699 = vmatpush1.bf16.msra.mxu0 0
        %700 = vmatprep.subr.bf16.mxu0 0
        %701 = vmatpush1.bf16.msra.mxu0 0
        %702 = vmatprep.subr.bf16.mxu0 0
        %703 = vmatpush1.bf16.msra.mxu0 0
        %704 = vmatprep.subr.bf16.mxu0 0
        %705 = vmatpush1.bf16.msra.mxu0 0
        %706 = vmatprep.subr.bf16.mxu0 0
        %707 = vmatpush1.bf16.msra.mxu0 0
        %708 = vmatprep.mubr.bf16.mxu0 0
        %709 = vmatmul.mubr.bf16.gmra.mrb[0].mxu0 %v629
        %v710 = vpop.f32.mrb[0].mxu0
        %v711 = vadd.f32 %v613, %v710
        %v712 = vpop.f32.mrb[0].mxu0
        %v713 = vpop.f32.mrb[0].mxu0
        %v714 = vadd.f32 %v613, %v713
        %v715 = vpop.f32.mrb[0].mxu0
        %716 = vmatprep.mubr.bf16.mxu0 0
        %717 = vmatmul.mubr.bf16.gmra.mrb[0].mxu0 %v632
        %v718 = vpop.f32.mrb[0].mxu0
        %v719 = vadd.f32 %v613, %v718
        %v720 = vpop.f32.mrb[0].mxu0
        %v721 = vpop.f32.mrb[0].mxu0
        %v722 = vadd.f32 %v613, %v721
        %v723 = vpop.f32.mrb[0].mxu0
        %724 = vmatprep.mubr.bf16.mxu0 0
        %725 = vmatmul.mubr.bf16.gmra.mrb[0].mxu0 %v635
        %v726 = vpop.f32.mrb[0].mxu0
        %v727 = vadd.f32 %v613, %v726
        %v728 = vpop.f32.mrb[0].mxu0
        %v729 = vpop.f32.mrb[0].mxu0
        %v730 = vadd.f32 %v613, %v729
        %v731 = vpop.f32.mrb[0].mxu0
        %732 = vmatprep.mubr.bf16.mxu0 0
        %733 = vmatmul.mubr.bf16.gmra.mrb[0].mxu0 %v638
        %v734 = vpop.f32.mrb[0].mxu0
        %v735 = vadd.f32 %v613, %v734
        %v736 = vpop.f32.mrb[0].mxu0
        %v737 = vpop.f32.mrb[0].mxu0
        %v738 = vadd.f32 %v613, %v737
        %v739 = vpop.f32.mrb[0].mxu0
        %740 = vmatprep.mubr.bf16.mxu0 0
        %741 = vmatmul.mubr.bf16.gmra.mrb[0].mxu0 %v641
        %v742 = vpop.f32.mrb[0].mxu0
        %v743 = vadd.f32 %v613, %v742
        %v744 = vpop.f32.mrb[0].mxu0
        %v745 = vpop.f32.mrb[0].mxu0
        %v746 = vadd.f32 %v613, %v745
        %v747 = vpop.f32.mrb[0].mxu0
        %748 = vmatprep.mubr.bf16.mxu0 0
        %749 = vmatmul.mubr.bf16.gmra.mrb[0].mxu0 %v644
        %v750 = vpop.f32.mrb[0].mxu0
        %v751 = vadd.f32 %v613, %v750
        %v752 = vpop.f32.mrb[0].mxu0
        %v753 = vpop.f32.mrb[0].mxu0
        %v754 = vadd.f32 %v613, %v753
        %v755 = vpop.f32.mrb[0].mxu0
        %756 = vmatprep.mubr.bf16.mxu0 0
        %757 = vmatmul.mubr.bf16.gmra.mrb[0].mxu0 %v647
        %v758 = vpop.f32.mrb[0].mxu0
        %v759 = vadd.f32 %v613, %v758
        %v760 = vpop.f32.mrb[0].mxu0
        %v761 = vpop.f32.mrb[0].mxu0
        %v762 = vadd.f32 %v613, %v761
        %v763 = vpop.f32.mrb[0].mxu0
        %764 = vmatprep.mubr.bf16.mxu0 0
        %765 = vmatmul.mubr.bf16.gmra.mrb[0].mxu0 %v650
        %v766 = vpop.f32.mrb[0].mxu0
        %v767 = vadd.f32 %v613, %v766
        %v768 = vpop.f32.mrb[0].mxu0
        %v769 = vpop.f32.mrb[0].mxu0
        %v770 = vadd.f32 %v613, %v769
        %v771 = vpop.f32.mrb[0].mxu0
        %772 = vmatprep.mubr.bf16.mxu0 0
        %773 = vmatmul.mubr.bf16.gmra.mrb[0].mxu0 %v653
        %v774 = vpop.f32.mrb[0].mxu0
        %v775 = vadd.f32 %v613, %v774
        %v776 = vpop.f32.mrb[0].mxu0
        %v777 = vpop.f32.mrb[0].mxu0
        %v778 = vadd.f32 %v613, %v777
        %v779 = vpop.f32.mrb[0].mxu0
        %780 = vmatprep.mubr.bf16.mxu0 0
        %781 = vmatmul.mubr.bf16.gmra.mrb[0].mxu0 %v656
        %v782 = vpop.f32.mrb[0].mxu0
        %v783 = vadd.f32 %v613, %v782
        %v784 = vpop.f32.mrb[0].mxu0
        %v785 = vpop.f32.mrb[0].mxu0
        %v786 = vadd.f32 %v613, %v785
        %v787 = vpop.f32.mrb[0].mxu0
        %788 = vmatprep.mubr.bf16.mxu0 0
        %789 = vmatmul.mubr.bf16.gmra.mrb[0].mxu0 %v659
        %v790 = vpop.f32.mrb[0].mxu0
        %v791 = vadd.f32 %v613, %v790
        %v792 = vpop.f32.mrb[0].mxu0
        %v793 = vpop.f32.mrb[0].mxu0
        %v794 = vadd.f32 %v613, %v793
        %v795 = vpop.f32.mrb[0].mxu0
        %796 = vmatprep.mubr.bf16.mxu0 0
        %797 = vmatmul.mubr.bf16.gmra.mrb[0].mxu0 %v662
        %v798 = vpop.f32.mrb[0].mxu0
        %v799 = vadd.f32 %v613, %v798
        %v800 = vpop.f32.mrb[0].mxu0
        %v801 = vpop.f32.mrb[0].mxu0
        %v802 = vadd.f32 %v613, %v801
        %v803 = vpop.f32.mrb[0].mxu0
        %804 = vmatprep.mubr.bf16.mxu0 0
        %805 = vmatmul.mubr.bf16.gmra.mrb[0].mxu0 %v665
        %v806 = vpop.f32.mrb[0].mxu0
        %v807 = vadd.f32 %v613, %v806
        %v808 = vpop.f32.mrb[0].mxu0
        %v809 = vpop.f32.mrb[0].mxu0
        %v810 = vadd.f32 %v613, %v809
        %v811 = vpop.f32.mrb[0].mxu0
        %812 = vmatprep.mubr.bf16.mxu0 0
        %813 = vmatmul.mubr.bf16.gmra.mrb[0].mxu0 %v668
        %v814 = vpop.f32.mrb[0].mxu0
        %v815 = vadd.f32 %v613, %v814
        %v816 = vpop.f32.mrb[0].mxu0
        %v817 = vpop.f32.mrb[0].mxu0
        %v818 = vadd.f32 %v613, %v817
        %v819 = vpop.f32.mrb[0].mxu0
        %820 = vmatprep.mubr.bf16.mxu0 0
        %821 = vmatmul.mubr.bf16.gmra.mrb[0].mxu0 %v671
        %v822 = vpop.f32.mrb[0].mxu0
        %v823 = vadd.f32 %v613, %v822
        %v824 = vpop.f32.mrb[0].mxu0
        %v825 = vpop.f32.mrb[0].mxu0
        %v826 = vadd.f32 %v613, %v825
        %v827 = vpop.f32.mrb[0].mxu0
        %828 = vmatprep.mubr.bf16.mxu0 0
        %829 = vmatmul.mubr.bf16.gmra.mrb[0].mxu0 %v674
        %v830 = vpop.f32.mrb[0].mxu0
        %v831 = vadd.f32 %v613, %v830
        %v832 = vpop.f32.mrb[0].mxu0
        %v833 = vpop.f32.mrb[0].mxu0
        %v834 = vadd.f32 %v613, %v833
        %v835 = vpop.f32.mrb[0].mxu0
        %836 = vdwg.mxu0
        %v837 = vmax.f32 %v711, 0.0
        %v838 = vmax.f32 %v714, 0.0
        %v839 = vmax.f32 %v719, 0.0
        %v840 = vmax.f32 %v722, 0.0
        %v841 = vmax.f32 %v727, 0.0
        %v842 = vmax.f32 %v730, 0.0
        %v843 = vmax.f32 %v735, 0.0
        %v844 = vmax.f32 %v738, 0.0
        %v845 = vmax.f32 %v743, 0.0
        %v846 = vmax.f32 %v746, 0.0
        %v847 = vmax.f32 %v751, 0.0
        %v848 = vmax.f32 %v754, 0.0
        %v849 = vmax.f32 %v759, 0.0
        %v850 = vmax.f32 %v762, 0.0
        %v851 = vmax.f32 %v767, 0.0
        %v852 = vmax.f32 %v770, 0.0
        %v853 = vmax.f32 %v775, 0.0
        %v854 = vmax.f32 %v778, 0.0
        %v855 = vmax.f32 %v783, 0.0
        %v856 = vmax.f32 %v786, 0.0
        %v857 = vmax.f32 %v791, 0.0
        %v858 = vmax.f32 %v794, 0.0
        %v859 = vmax.f32 %v799, 0.0
        %v860 = vmax.f32 %v802, 0.0
        %v861 = vmax.f32 %v807, 0.0
        %v862 = vmax.f32 %v810, 0.0
        %v863 = vmax.f32 %v815, 0.0
        %v864 = vmax.f32 %v818, 0.0
        %v865 = vmax.f32 %v823, 0.0
        %v866 = vmax.f32 %v826, 0.0
        %v867 = vmax.f32 %v831, 0.0
        %v868 = vmax.f32 %v834, 0.0
        %v869 = vld [vmem:[%s5] sm:$0x1]
        %v870 = vpack.c.bf16 %v838, %v837
        %v871 = vpack.c.bf16 %v840, %v839
        %v872 = vpack.c.bf16 %v842, %v841
        %v873 = vpack.c.bf16 %v844, %v843
        %v874 = vpack.c.bf16 %v846, %v845
        %v875 = vpack.c.bf16 %v848, %v847
        %v876 = vpack.c.bf16 %v850, %v849
        %v877 = vpack.c.bf16 %v852, %v851
        %v878 = vpack.c.bf16 %v854, %v853
        %v879 = vpack.c.bf16 %v856, %v855
        %v880 = vpack.c.bf16 %v858, %v857
        %v881 = vpack.c.bf16 %v860, %v859
        %v882 = vpack.c.bf16 %v862, %v861
        %v883 = vpack.c.bf16 %v864, %v863
        %v884 = vpack.c.bf16 %v866, %v865
        %v885 = vpack.c.bf16 %v868, %v867
        %v886 = vld [vmem:[#allocation2] sm:$0x1]
        %888 = vset.pattern.permute.xlu0 0
        %889 = vperm.xlu0 %888, %v886
        %v890 = vpop.permute.xlu0 %889
        %v892 = vlaneseq
        %v893 = vshrl.u32 %v892, 7
        %v894 = vsub.s32 0, %v893
        %v895 = vrot.slane %v890, %v894
        %vm896 = vcmask 523264
        %v898 = vsel %vm896, %v869, 0
        %v901 = vsel %vm896, %v870, 0
        %v904 = vsel %vm896, %v871, 0
        %v907 = vsel %vm896, %v872, 0
        %v910 = vsel %vm896, %v873, 0
        %v913 = vsel %vm896, %v874, 0
        %v916 = vsel %vm896, %v875, 0
        %v919 = vsel %vm896, %v876, 0
        %v922 = vsel %vm896, %v877, 0
        %v925 = vsel %vm896, %v878, 0
        %v928 = vsel %vm896, %v879, 0
        %v931 = vsel %vm896, %v880, 0
        %v934 = vsel %vm896, %v881, 0
        %v937 = vsel %vm896, %v882, 0
        %v940 = vsel %vm896, %v883, 0
        %v943 = vsel %vm896, %v884, 0
        %v946 = vsel %vm896, %v885, 0
        %948 = vmatprep.subr.bf16.mxu0 0
        %949 = vmatpush1.bf16.xpose.msra.mxu0 %v901
        %950 = vmatprep.subr.bf16.mxu0 0
        %951 = vmatpush1.bf16.xpose.msra.mxu0 %v904
        %952 = vmatprep.subr.bf16.mxu0 0
        %953 = vmatpush1.bf16.xpose.msra.mxu0 %v907
        %954 = vmatprep.subr.bf16.mxu0 0
        %955 = vmatpush1.bf16.xpose.msra.mxu0 %v910
        %956 = vmatprep.subr.bf16.mxu0 0
        %957 = vmatpush1.bf16.xpose.msra.mxu0 %v913
        %958 = vmatprep.subr.bf16.mxu0 0
        %959 = vmatpush1.bf16.xpose.msra.mxu0 %v916
        %960 = vmatprep.subr.bf16.mxu0 0
        %961 = vmatpush1.bf16.xpose.msra.mxu0 %v919
        %962 = vmatprep.subr.bf16.mxu0 0
        %963 = vmatpush1.bf16.xpose.msra.mxu0 %v922
        %964 = vmatprep.subr.bf16.mxu0 0
        %965 = vmatpush1.bf16.xpose.msra.mxu0 %v925
        %966 = vmatprep.subr.bf16.mxu0 0
        %967 = vmatpush1.bf16.xpose.msra.mxu0 %v928
        %968 = vmatprep.subr.bf16.mxu0 0
        %969 = vmatpush1.bf16.xpose.msra.mxu0 %v931
        %970 = vmatprep.subr.bf16.mxu0 0
        %971 = vmatpush1.bf16.xpose.msra.mxu0 %v934
        %972 = vmatprep.subr.bf16.mxu0 0
        %973 = vmatpush1.bf16.xpose.msra.mxu0 %v937
        %974 = vmatprep.subr.bf16.mxu0 0
        %975 = vmatpush1.bf16.xpose.msra.mxu0 %v940
        %976 = vmatprep.subr.bf16.mxu0 0
        %977 = vmatpush1.bf16.xpose.msra.mxu0 %v943
        %978 = vmatprep.subr.bf16.mxu0 0
        %979 = vmatpush1.bf16.xpose.msra.mxu0 %v946
        %980 = vmatprep.mubr.bf16.mxu0 0
        %981 = vmatmul.mubr.bf16.gmra.mrb[0].mxu0 %v898
        %v982 = vpop.f32.mrb[0].mxu0
        %v983 = vadd.f32 %v895, %v982
        %v984 = vpop.f32.mrb[0].mxu0
        %v985 = vadd.f32 %v895, %v984
        %v986 = vpop.f32.mrb[0].mxu0
        %v987 = vpop.f32.mrb[0].mxu0
        %988 = vdwg.mxu0
        %v991 = vcombine.low %v983, %v985
        %v993 = vunpack.c.l.s4 1966171168
        %v994 = vunpack.c.0.s8 %v993
        %v995 = vlaneseq
        %v996 = vshrl.u32 %v995, 7
        %v997 = vsub.s32 %v994, %v996
        %v998 = vrot.slane %v991, %v997
        %v1000 = vunpack.c.l.s4 1966171168
        %v1001 = vunpack.c.0.s8 %v1000
        %v1002 = vlaneseq
        %v1003 = vshrl.u32 %v1002, 7
        %v1004 = vsub.s32 %v1001, %v1003
        %v1005 = vrot.slane %v998, %v1004
        %v1007 = vlaneseq
        %vm1008 = vcmp.ge.s32.totalorder %v1007, 0
        %vm1009 = vcmp.lt.s32.totalorder %v1007, 256
        %vm1010 = vmand %vm1008, %vm1009
        %1011 = vst.msk [vmem:[%s274] sm:$0x3] %vm1010, %v1005
        %s1012 = sand.u32 %s183, 1
        %s1013 = scalar_lea.sflag [#allocation4], %s1012
        %s1014 = sand.u32 %s183, 1
        %s1015 = smul.addr %s1014, 2
        %s1016 = scalar_lea.vmem [#allocation3], %s1015
        // Predicated region
        $region49: #{value_network_forward.1} parent=47 // pred_check
          %p1017 = pneg %p193
        $region50: #{value_network_forward.1} parent=47 // pred_check_branch
          %1019 = sbr.rel (%p1017) target = $region52
        $region51: #{value_network_forward.1} parent=47 // pred_region
          %s1020 = smul.u32 2, %s23
          %s1022 = ssub.s32 32, 32
          %1023 = vsyncadd %s1013, %s1022
          %s1024 = smul.addr %s1020, 16
          %s1025 = scalar_lea.hbm %s7, %s1024
          %s1027 = sshll.u32 %s1016, 4
          %s1028 = int_to_ptr.vmem [resolvable:$true] %s1027
          %1030 = dma.vmem_to_hbm [thread:$0]  %s1028, 32, %s1025, %s1013
        $region52: #{value_network_forward.1} parent=47 // pred_fallthru
          _
      $region48: #{value_network_forward.1} parent=5 // pred_fallthru
        _
      %p1031 = scmp.le.s32.totalorder 2, %s18
      // Predicated region
      $region53: #{value_network_forward.1} parent=5 // pred_check
        %p1032 = pneg %p1031
      $region54: #{value_network_forward.1} parent=5 // pred_check_branch
        %1034 = sbr.rel (%p1032) target = $region56
      $region55: #{value_network_forward.1} parent=5 // pred_region
        %s1035 = ssub.s32 %s18, 2
        // Predicated region
        $region57: #{value_network_forward.1} parent=55 // pred_check
          %p1036 = pneg %p199
        $region58: #{value_network_forward.1} parent=55 // pred_check_branch
          %1038 = sbr.rel (%p1036) target = $region60
        $region59: #{value_network_forward.1} parent=55 // pred_region
          %s1039 = sand.u32 %s184, 1
          %s1040 = scalar_lea.sflag [#allocation4], %s1039
          %s1041 = sand.u32 %s184, 1
          %s1042 = smul.addr %s1041, 2
          %s1043 = scalar_lea.vmem [#allocation3], %s1042
          %1044 = dma.done %s1040, 32
        $region60: #{value_network_forward.1} parent=55 // pred_fallthru
          _
      $region56: #{value_network_forward.1} parent=5 // pred_fallthru
        _
    $region6: #{value_network_forward.1} parent=1 // loop_footer
      %s22 = sadd.s32 1, %s18
    $region7: #{value_network_forward.1} parent=1 // loop_footer_branch
      %17 = sbr.rel target = $region3
    $region8: #{value_network_forward.1} parent=1 // loop_exit
      _
    %1045 = vsyncpa [#allocation4], 1
    %s1046 = scalar_lea.sflag [#allocation4], 1
    %1047 = vsyncpa %s1046, 1

</llo_original>
